<compile_context>
chip_gen: v6e
topology: v6e:2x2x1
jax: 0.10.0
libtpu: 0.0.40
codegen_flags: <defaults>
</compile_context>

<pallas_src>
import functools

import jax
import jax.numpy as jnp
from jax.experimental import pallas as pl
from jax.experimental.pallas import tpu as pltpu


def _round_up(n, m):
    return (n + m - 1) // m * m


def _linear_qnet_kernel(x_ref, w1_ref, b1_ref, w2_ref, b2_ref, out_ref):
    # x_ref  : (TM, D_in)   f32   (native input; cast to bf16 in-kernel, VPU-free)
    # w1_ref : (D_in, H)    bf16  (pre-transposed once at init, VMEM-resident)
    # b1_ref : (1, H)       f32
    # w2_ref : (H, D_out)   bf16  (pre-transposed, unpadded)
    # b2_ref : (1, D_out)   f32
    # out_ref: (TM, D_out)  out dtype (unpadded -> minimal HBM writeback)
    x = x_ref[...].astype(w1_ref.dtype)
    h = jnp.dot(x, w1_ref[...], preferred_element_type=jnp.float32)
    h = jnp.maximum(h + b1_ref[...], 0.0)                  # f32 elementwise (v5e-safe)

    y = jnp.dot(h.astype(w2_ref.dtype), w2_ref[...],
                preferred_element_type=jnp.float32)
    out_ref[...] = (y + b2_ref[...]).astype(out_ref.dtype)


def prepare_linear_qnet_params(w1, b1, w2, b2, compute_dtype=jnp.bfloat16):
    """One-time layout/dtype preparation (outside the per-call path).

    Args use torch nn.Linear layout:
      w1: (H, D_in), b1: (H,), w2: (D_out, H), b2: (D_out,)

    Weights are stored bf16 (half the HBM->VMEM DMA bytes); both matmuls still
    accumulate in f32, so Q-values differ from a pure-f32 forward only by bf16
    quantization of x, W1, W2 and the hidden activation.
    """
    H, _ = w1.shape
    D_out = w2.shape[0]

    w1_t = jnp.asarray(w1, jnp.float32).T.astype(compute_dtype)      # (D_in, H)
    b1_r = jnp.asarray(b1, jnp.float32).reshape(1, H)                # (1, H)
    w2_t = jnp.asarray(w2, jnp.float32).T.astype(compute_dtype)      # (H, D_out)
    b2_r = jnp.asarray(b2, jnp.float32).reshape(1, D_out)            # (1, D_out)

    return {"w1": w1_t, "b1": b1_r, "w2": w2_t, "b2": b2_r}


def _choose_tile(B, block_rows):
    """Pick (tm, b_pad).

    Preferences (in order): no batch padding; >=2 grid steps for large B so
    "parallel" can shard over v7x's two TensorCores; tm a multiple of 8.
    tm == B (full array dim) is always legal for tiny batches.
    """
    if B <= 16:
        return B, B                                   # single tile, no padding
    cap = min(block_rows, _round_up((B + 1) // 2, 8)) # >=2 grid steps
    cap = max((cap // 8) * 8, 8)
    for tm in range(cap, 7, -8):                      # prefer a tile dividing B
        if B % tm == 0:
            return tm, B
    return cap, _round_up(B, cap)                     # fall back to padding


@functools.partial(jax.jit, static_argnames=("block_rows", "out_dtype"))
def _forward_impl(x, w1, b1, w2, b2, *, block_rows, out_dtype):
    B, D_in = x.shape
    H = w1.shape[1]
    D_out = w2.shape[1]

    tm, b_pad = _choose_tile(B, block_rows)
    xb = x if b_pad == B else jnp.pad(x, ((0, b_pad - B), (0, 0)))
    grid = (b_pad // tm,)

    out_itemsize = jnp.dtype(out_dtype).itemsize
    flops = 2 * b_pad * (D_in * H + H * D_out)
    bytes_accessed = (
        xb.size * xb.dtype.itemsize
        + w1.size * w1.dtype.itemsize + w2.size * w2.dtype.itemsize
        + b1.size * b1.dtype.itemsize + b2.size * b2.dtype.itemsize
        + b_pad * D_out * out_itemsize)

    out = pl.pallas_call(
        _linear_qnet_kernel,
        out_shape=jax.ShapeDtypeStruct((b_pad, D_out), out_dtype),
        grid=grid,
        in_specs=[
            pl.BlockSpec((tm, D_in), lambda i: (i, 0)),   # batch tile, pipelined
            pl.BlockSpec((D_in, H), lambda i: (0, 0)),    # weights stay resident
            pl.BlockSpec((1, H), lambda i: (0, 0)),
            pl.BlockSpec((H, D_out), lambda i: (0, 0)),
            pl.BlockSpec((1, D_out), lambda i: (0, 0)),
        ],
        out_specs=pl.BlockSpec((tm, D_out), lambda i: (i, 0)),
        compiler_params=pltpu.CompilerParams(
            dimension_semantics=("parallel",),            # v7x: batch over 2 TCs
            vmem_limit_bytes=32 * 1024 * 1024,            # raises v5e's 16 MiB default
        ),
        cost_estimate=pl.CostEstimate(
            flops=flops, transcendentals=0, bytes_accessed=bytes_accessed),
    )(xb, w1, b1, w2, b2)

    return out if b_pad == B else out[:B]


def linear_qnet_forward(x, params, block_rows=2048, out_dtype=jnp.float32):
    """Fused LinearQNet forward: relu(x @ W1^T + b1) @ W2^T + b2.

    `params` comes from prepare_linear_qnet_params (torch-layout weights
    prepped once).  Pass out_dtype=jnp.bfloat16 to halve output writeback.
    """
    return _forward_impl(
        x, params["w1"], params["b1"], params["w2"], params["b2"],
        block_rows=block_rows, out_dtype=out_dtype)


def _torch_linear_init(key, out_features, in_features):
    """Deterministic init mimicking torch nn.Linear default (+/- 1/sqrt(fan_in))."""
    kw, kb = jax.random.split(key)
    bound = 1.0 / (in_features ** 0.5)
    w = jax.random.uniform(kw, (out_features, in_features), jnp.float32,
                           minval=-bound, maxval=bound)
    b = jax.random.uniform(kb, (out_features,), jnp.float32,
                           minval=-bound, maxval=bound)
    return w, b


# TODO(synk): save()/load() checkpoint I/O from the torch module is host-side
# file handling with no Pallas equivalent; parameter prep is exposed via
# prepare_linear_qnet_params instead.

if __name__ == "__main__":
    # Small shapes consistent with LinearQNet(input_size, hidden_size, output_size)
    batch = 8
    input_size = 16
    hidden_size = 32
    output_size = 4

    key = jax.random.PRNGKey(0)
    kx, k1, k2 = jax.random.split(key, 3)

    x = jax.random.normal(kx, (batch, input_size), jnp.float32)
    w1, b1 = _torch_linear_init(k1, hidden_size, input_size)
    w2, b2 = _torch_linear_init(k2, output_size, hidden_size)

    params = prepare_linear_qnet_params(w1, b1, w2, b2)   # one-time prep
    out = linear_qnet_forward(x, params)
    out = jax.block_until_ready(out)

    # Reference 1: bf16-quantized x/weights/hidden, f32 accumulation (matches kernel).
    f32 = jnp.float32
    w1q = params["w1"].astype(f32)                         # (D_in, H)
    w2q = params["w2"].astype(f32)                         # (H, D_out)
    xq = x.astype(jnp.bfloat16).astype(f32)
    h_ref = jnp.maximum(xq @ w1q + b1, 0.0)
    ref_bf16 = h_ref.astype(jnp.bfloat16).astype(f32) @ w2q + b2

    # Reference 2: full f32 torch-style forward (looser tolerance for bf16 storage).
    ref_f32 = jnp.maximum(x @ w1.T + b1, 0.0) @ w2.T + b2

    assert out.shape == (batch, output_size)
    assert out.dtype == jnp.float32
    assert jnp.allclose(out, ref_bf16, atol=1e-3, rtol=1e-3), "mismatch vs bf16 reference"
    assert jnp.allclose(out, ref_f32, atol=5e-2, rtol=5e-2), "mismatch vs f32 reference"

    print("KERNEL_OK")
</pallas_src>

<mosaic_0001>
module attributes {stable_mosaic.version = 11 : i64} {
  func.func @_linear_qnet_kernel(%arg0: i32, %arg1: memref<8x16xf32, #tpu.memory_space<vmem>>, %arg2: memref<16x32xbf16, #tpu.memory_space<vmem>>, %arg3: memref<1x32xf32, #tpu.memory_space<vmem>>, %arg4: memref<32x4xbf16, #tpu.memory_space<vmem>>, %arg5: memref<1x4xf32, #tpu.memory_space<vmem>>, %arg6: memref<8x4xf32, #tpu.memory_space<vmem>>) attributes {dimension_semantics = [#tpu.dimension_semantics<parallel>], iteration_bounds = array<i64: 1>, scalar_prefetch = 0 : i64, scratch_operands = 0 : i64, tpu.core_type = #tpu.core_type<tc>, window_params = [{transform_indices = @transform_0, window_bounds = array<i64: 8, 16>}, {pipeline_mode = #tpu.pipeline_mode<synchronous>, transform_indices = @transform_1, window_bounds = array<i64: 16, 32>}, {pipeline_mode = #tpu.pipeline_mode<synchronous>, transform_indices = @transform_2, window_bounds = array<i64: 1, 32>}, {pipeline_mode = #tpu.pipeline_mode<synchronous>, transform_indices = @transform_3, window_bounds = array<i64: 32, 4>}, {pipeline_mode = #tpu.pipeline_mode<synchronous>, transform_indices = @transform_4, window_bounds = array<i64: 1, 4>}, {transform_indices = @transform_5, window_bounds = array<i64: 8, 4>}]} {
    %c0 = arith.constant 0 : index
    %c0_0 = arith.constant 0 : index
    %0 = vector.load %arg1[%c0, %c0_0] : memref<8x16xf32, #tpu.memory_space<vmem>>, vector<8x16xf32>
    %1 = arith.truncf %0 : vector<8x16xf32> to vector<8x16xbf16>
    %c0_1 = arith.constant 0 : index
    %c0_2 = arith.constant 0 : index
    %2 = vector.load %arg2[%c0_1, %c0_2] : memref<16x32xbf16, #tpu.memory_space<vmem>>, vector<16x32xbf16>
    %cst = arith.constant dense<0.000000e+00> : vector<8x32xf32>
    %3 = tpu.matmul %1, %2, %cst {dimension_numbers = #tpu.dot_dimension_numbers<[1], [0], [0], [1], [0, 0, 1, 1], [], []>} : vector<8x16xbf16>, vector<16x32xbf16>, vector<8x32xf32> -> vector<8x32xf32>
    %c0_3 = arith.constant 0 : index
    %c0_4 = arith.constant 0 : index
    %4 = vector.load %arg3[%c0_3, %c0_4] : memref<1x32xf32, #tpu.memory_space<vmem>>, vector<1x32xf32>
    %5 = vector.broadcast %4 : vector<1x32xf32> to vector<8x32xf32>
    %6 = arith.addf %3, %5 : vector<8x32xf32>
    %cst_5 = arith.constant 0.000000e+00 : f32
    %7 = vector.broadcast %cst_5 : f32 to vector<8x32xf32>
    %8 = arith.maximumf %6, %7 : vector<8x32xf32>
    %9 = arith.truncf %8 : vector<8x32xf32> to vector<8x32xbf16>
    %c0_6 = arith.constant 0 : index
    %c0_7 = arith.constant 0 : index
    %10 = vector.load %arg4[%c0_6, %c0_7] : memref<32x4xbf16, #tpu.memory_space<vmem>>, vector<32x4xbf16>
    %cst_8 = arith.constant dense<0.000000e+00> : vector<8x4xf32>
    %11 = tpu.matmul %9, %10, %cst_8 {dimension_numbers = #tpu.dot_dimension_numbers<[1], [0], [0], [1], [0, 0, 1, 1], [], []>} : vector<8x32xbf16>, vector<32x4xbf16>, vector<8x4xf32> -> vector<8x4xf32>
    %c0_9 = arith.constant 0 : index
    %c0_10 = arith.constant 0 : index
    %12 = vector.load %arg5[%c0_9, %c0_10] : memref<1x4xf32, #tpu.memory_space<vmem>>, vector<1x4xf32>
    %13 = vector.broadcast %12 : vector<1x4xf32> to vector<8x4xf32>
    %14 = arith.addf %11, %13 : vector<8x4xf32>
    %c0_11 = arith.constant 0 : index
    %c0_12 = arith.constant 0 : index
    %15 = vector.load %arg6[%c0_11, %c0_12] : memref<8x4xf32, #tpu.memory_space<vmem>>, vector<8x4xf32>
    tpu.vector_store %arg6[%c0_11, %c0_12], %14 {strides = array<i32>} : memref<8x4xf32, #tpu.memory_space<vmem>>, vector<8x4xf32>,
    return
  }
  func.func @transform_0(%arg0: i32) -> (i32, i32) {
    %c0_i32 = arith.constant 0 : i32
    %c0_i32_0 = arith.constant 0 : i32
    return %arg0, %c0_i32 : i32, i32
  }
  func.func @transform_1(%arg0: i32) -> (i32, i32) {
    %c0_i32 = arith.constant 0 : i32
    %c0_i32_0 = arith.constant 0 : i32
    %c0_i32_1 = arith.constant 0 : i32
    return %c0_i32, %c0_i32_0 : i32, i32
  }
  func.func @transform_2(%arg0: i32) -> (i32, i32) {
    %c0_i32 = arith.constant 0 : i32
    %c0_i32_0 = arith.constant 0 : i32
    %c0_i32_1 = arith.constant 0 : i32
    return %c0_i32, %c0_i32_0 : i32, i32
  }
  func.func @transform_3(%arg0: i32) -> (i32, i32) {
    %c0_i32 = arith.constant 0 : i32
    %c0_i32_0 = arith.constant 0 : i32
    %c0_i32_1 = arith.constant 0 : i32
    return %c0_i32, %c0_i32_0 : i32, i32
  }
  func.func @transform_4(%arg0: i32) -> (i32, i32) {
    %c0_i32 = arith.constant 0 : i32
    %c0_i32_0 = arith.constant 0 : i32
    %c0_i32_1 = arith.constant 0 : i32
    return %c0_i32, %c0_i32_0 : i32, i32
  }
  func.func @transform_5(%arg0: i32) -> (i32, i32) {
    %c0_i32 = arith.constant 0 : i32
    %c0_i32_0 = arith.constant 0 : i32
    return %arg0, %c0_i32 : i32, i32
  }
}

</mosaic_0001>

<llo_original>
// kernel: _forward_impl.1
$region0: #{_forward_impl.1}
  #allocation0 [shape = 'u32[]', space=smem, size = 0x4, offset = 0x4, fixed_abs, tag = 'smem constant byte address 0x4 - core index']
  #allocation1 [shape = 'u32[144,128]{1,0:T(1,128)}', space=vmem, size = 0x12000, scoped, tag = 'internal scratch']
  %s0 = inlined_call_operand.vmem [shape: f32[8,16], index: 0, kind: input, shape index: {}]
  %s1 = inlined_call_operand.vmem [shape: bf16[16,32], index: 1, kind: input, shape index: {}]
  %s2 = inlined_call_operand.vmem [shape: f32[1,32], index: 2, kind: input, shape index: {}]
  %s3 = inlined_call_operand.vmem [shape: bf16[32,4], index: 3, kind: input, shape index: {}]
  %s4 = inlined_call_operand.vmem [shape: f32[1,4], index: 4, kind: input, shape index: {}]
  %s5 = inlined_call_operand.vmem [shape: f32[8,4], index: 5, kind: output, shape index: {}]
  %s6 = sld [smem:[#allocation0]]
  $region30: #{_forward_impl.1} parent=0
    _
  %s8 = ssub.s32 1, %s6
  %s9 = scalar_select 0, %s8, %s6
  // Predicated region
  $region2: #{_forward_impl.1} parent=0 // pred_check
    _
  $region3: #{_forward_impl.1} parent=0 // pred_check_branch
    %11 = sbr.rel (0) target = $region5
  $region4: #{_forward_impl.1} parent=0 // pred_region
    _
  $region5: #{_forward_impl.1} parent=0 // pred_fallthru
    _
  // Predicated region
  $region6: #{_forward_impl.1} parent=0 // pred_check
    _
  $region7: #{_forward_impl.1} parent=0 // pred_check_branch
    %13 = sbr.rel (0) target = $region9
  $region8: #{_forward_impl.1} parent=0 // pred_region
    _
  $region9: #{_forward_impl.1} parent=0 // pred_fallthru
    _
  // Predicated region
  $region10: #{_forward_impl.1} parent=0 // pred_check
    _
  $region11: #{_forward_impl.1} parent=0 // pred_check_branch
    %15 = sbr.rel (0) target = $region13
  $region12: #{_forward_impl.1} parent=0 // pred_region
    _
  $region13: #{_forward_impl.1} parent=0 // pred_fallthru
    _
  // Predicated region
  $region14: #{_forward_impl.1} parent=0 // pred_check
    _
  $region15: #{_forward_impl.1} parent=0 // pred_check_branch
    %17 = sbr.rel (0) target = $region17
  $region16: #{_forward_impl.1} parent=0 // pred_region
    _
  $region17: #{_forward_impl.1} parent=0 // pred_fallthru
    _
  // Predicated region
  $region18: #{_forward_impl.1} parent=0 // pred_check
    _
  $region19: #{_forward_impl.1} parent=0 // pred_check_branch
    %19 = sbr.rel (0) target = $region21
  $region20: #{_forward_impl.1} parent=0 // pred_region
    _
  $region21: #{_forward_impl.1} parent=0 // pred_fallthru
    _
  %v21 = vld [vmem:[%s0] sm:$0xff]
  %v22 = vpack.c.bf16 %v21, %v21
  %v23 = vld [vmem:[%s1] sm:$0xf]
  %v24 = vld [vmem:[%s1 + $0x4] sm:$0xf]
  %v25 = vld [vmem:[%s2] sm:$0x1]
  %v27 = vlaneseq
  %v28 = vshrl.u32 %v27, 7
  %v29 = vsub.s32 0, %v28
  %v30 = vrot.slane %v25, %v29
  %v34 = vunpack.c.l.b16 %v23
  %v35 = vunpack.c.l.b16 %v24
  %v36 = vpack.c.b16 %v35, %v34
  %vm38 = vcmask 130048
  %v40 = vsel %vm38, %v22, 0
  %42 = vmatprep.subr.bf16.mxu0 0
  %43 = vmatpush1.bf16.msra.mxu0 0
  %44 = vmatprep.subr.bf16.mxu0 0
  %45 = vmatpush1.bf16.msra.mxu0 0
  %46 = vmatprep.subr.bf16.mxu0 0
  %47 = vmatpush1.bf16.msra.mxu0 0
  %48 = vmatprep.subr.bf16.mxu0 0
  %49 = vmatpush1.bf16.msra.mxu0 0
  %50 = vmatprep.subr.bf16.mxu0 0
  %51 = vmatpush1.bf16.msra.mxu0 0
  %52 = vmatprep.subr.bf16.mxu0 0
  %53 = vmatpush1.bf16.msra.mxu0 0
  %54 = vmatprep.subr.bf16.mxu0 0
  %55 = vmatpush1.bf16.msra.mxu0 0
  %56 = vmatprep.subr.bf16.mxu0 0
  %57 = vmatpush1.bf16.msra.mxu0 %v36
  %58 = vmatprep.subr.bf16.mxu0 0
  %59 = vmatpush2.bf16.msra.mxu0 0
  %60 = vmatprep.subr.bf16.mxu0 0
  %61 = vmatpush2.bf16.msra.mxu0 0
  %62 = vmatprep.subr.bf16.mxu0 0
  %63 = vmatpush2.bf16.msra.mxu0 0
  %64 = vmatprep.subr.bf16.mxu0 0
  %65 = vmatpush2.bf16.msra.mxu0 0
  %66 = vmatprep.subr.bf16.mxu0 0
  %67 = vmatpush2.bf16.msra.mxu0 0
  %68 = vmatprep.subr.bf16.mxu0 0
  %69 = vmatpush2.bf16.msra.mxu0 0
  %70 = vmatprep.subr.bf16.mxu0 0
  %71 = vmatpush2.bf16.msra.mxu0 0
  %72 = vmatprep.subr.bf16.mxu0 0
  %73 = vmatpush2.bf16.msra.mxu0 0
  %74 = vmatprep.mubr.bf16.mxu0 0
  %75 = vmatmul.mubr.bf16.gmra.mxu0 %v40
  %v76 = vpop.f32.mrf.mxu0
  %v77 = vadd.f32 %v30, %v76
  %v78 = vpop.f32.mrf.mxu0
  %v79 = vpop.f32.mrf.mxu0
  %v80 = vpop.f32.mrf.mxu0
  %81 = vdwg.mxu0
  %v82 = vmax.f32 %v77, 0.0
  %v83 = vpack.c.bf16 %v82, %v82
  %v84 = vld [vmem:[%s3] sm:$0xf]
  %v85 = vld [vmem:[%s3 + $0x4] sm:$0xf]
  %v86 = vld [vmem:[%s3 + $0x8] sm:$0xf]
  %v87 = vld [vmem:[%s3 + $0xc] sm:$0xf]
  %v88 = vld [vmem:[%s4] sm:$0x1]
  %v90 = vlaneseq
  %v91 = vshrl.u32 %v90, 7
  %v92 = vsub.s32 0, %v91
  %v93 = vrot.slane %v88, %v92
  %v99 = vunpack.c.l.b16 %v84
  %v100 = vunpack.c.l.b16 %v85
  %v101 = vunpack.c.l.b16 %v86
  %v102 = vunpack.c.l.b16 %v87
  %v103 = vpack.c.b16 %v100, %v99
  %v104 = vpack.c.b16 %v102, %v101
  %vm107 = vcmask 261120
  %v109 = vsel %vm107, %v83, 0
  %111 = vmatprep.subr.bf16.mxu0 0
  %112 = vmatpush1.bf16.msra.mxu0 0
  %113 = vmatprep.subr.bf16.mxu0 0
  %114 = vmatpush1.bf16.msra.mxu0 0
  %115 = vmatprep.subr.bf16.mxu0 0
  %116 = vmatpush1.bf16.msra.mxu0 0
  %117 = vmatprep.subr.bf16.mxu0 0
  %118 = vmatpush1.bf16.msra.mxu0 0
  %119 = vmatprep.subr.bf16.mxu0 0
  %120 = vmatpush1.bf16.msra.mxu0 0
  %121 = vmatprep.subr.bf16.mxu0 0
  %122 = vmatpush1.bf16.msra.mxu0 0
  %123 = vmatprep.subr.bf16.mxu0 0
  %124 = vmatpush1.bf16.msra.mxu0 %v104
  %125 = vmatprep.subr.bf16.mxu0 0
  %126 = vmatpush1.bf16.msra.mxu0 %v103
  %127 = vmatprep.subr.bf16.mxu0 0
  %128 = vmatpush2.bf16.msra.mxu0 0
  %129 = vmatprep.subr.bf16.mxu0 0
  %130 = vmatpush2.bf16.msra.mxu0 0
  %131 = vmatprep.subr.bf16.mxu0 0
  %132 = vmatpush2.bf16.msra.mxu0 0
  %133 = vmatprep.subr.bf16.mxu0 0
  %134 = vmatpush2.bf16.msra.mxu0 0
  %135 = vmatprep.subr.bf16.mxu0 0
  %136 = vmatpush2.bf16.msra.mxu0 0
  %137 = vmatprep.subr.bf16.mxu0 0
  %138 = vmatpush2.bf16.msra.mxu0 0
  %139 = vmatprep.subr.bf16.mxu0 0
  %140 = vmatpush2.bf16.msra.mxu0 0
  %141 = vmatprep.subr.bf16.mxu0 0
  %142 = vmatpush2.bf16.msra.mxu0 0
  %143 = vmatprep.mubr.bf16.mxu0 0
  %144 = vmatmul.mubr.bf16.gmra.mxu0 %v109
  %v145 = vpop.f32.mrf.mxu0
  %v146 = vadd.f32 %v93, %v145
  %v147 = vpop.f32.mrf.mxu0
  %v148 = vpop.f32.mrf.mxu0
  %v149 = vpop.f32.mrf.mxu0
  %150 = vdwg.mxu0
  %vm151 = vcmask 31744
  %152 = vst.msk [vmem:[%s5] sm:$0xff] %vm151, %v146
  // Predicated region
  $region22: #{_forward_impl.1} parent=0 // pred_check
    _
  $region23: #{_forward_impl.1} parent=0 // pred_check_branch
    %154 = sbr.rel (0) target = $region25
  $region24: #{_forward_impl.1} parent=0 // pred_region
    _
  $region25: #{_forward_impl.1} parent=0 // pred_fallthru
    _
  // Predicated region
  $region26: #{_forward_impl.1} parent=0 // pred_check
    _
  $region27: #{_forward_impl.1} parent=0 // pred_check_branch
    %156 = sbr.rel (0) target = $region29
  $region28: #{_forward_impl.1} parent=0 // pred_region
    _
  $region29: #{_forward_impl.1} parent=0 // pred_fallthru
    _

</llo_original>
